<compile_context>
chip_gen: v5e
topology: v5e:2x2
jax: 0.10.0
libtpu: 0.0.40
codegen_flags: <defaults>
</compile_context>

<pallas_src>
import jax
import jax.numpy as jnp
from jax import lax
from jax.experimental import pallas as pl
from jax.experimental.pallas import tpu as pltpu


def _round_up(a: int, b: int) -> int:
    return (a + b - 1) // b * b


def linear_classifier_kernel(x_ref, a_ref, nsr_ref, c_ref, w_ref, b_ref, o_ref):
    x = x_ref[...]                                     # (TN, D)    f32, natural layout
    a = a_ref[...]                                     # (M_pad, D) f32, = (2s)*mu

    # MXU: contract the feature axis -> (M_pad, TN); batch axis lands on lanes.
    xmu = lax.dot_general(a, x, (((1,), (1,)), ((), ())),
                          preferred_element_type=jnp.float32)      # = 2s*<mu, x>

    # -s*||x||^2 per sample, produced directly as a (1, TN) lane-dense row via a
    # 1-row MXU contraction (avoids a (TN,1)->(1,TN) cross-lane transpose).
    xsq = lax.dot_general(nsr_ref[...], x * x, (((1,), (1,)), ((), ())),
                          preferred_element_type=jnp.float32)      # (1, TN)

    # arg = -||x - mu||^2 / (2*var);  clamping phi at 1 == clamping dist at 0
    # (guards f32 cancellation for near-coincident points).
    arg = xmu + xsq + c_ref[...]                       # (M_pad, TN)
    phi = jnp.minimum(jnp.exp(arg), 1.0)               # EUP exp

    # nn.Linear(M, 1): 1-wide output -> VPU multiply + sublane reduce.
    out = jnp.sum(phi * w_ref[...], axis=0, keepdims=True)         # (1, TN)
    o_ref[...] = out + b_ref[0, 0]


def linear_classifier(x, means, weight, bias, *, var=1.0, tn=2048):
    """x: (N, D), means: (M, D), weight: (1, M), bias: (1,) -> (N, 1) float32."""
    N, D = x.shape
    M, Dm = means.shape
    assert Dm == D, (means.shape, x.shape)

    s = 1.0 / (2.0 * var)
    M_pad = _round_up(M, 8)

    # --- batch tiling -------------------------------------------------------
    # Lane-dense over N; as large as reasonable (per-step overhead ~0.35us), but:
    #   * keep >= 2 grid steps for large N so "parallel" uses both v7x TensorCores,
    #   * cap so the (M_pad, TN) f32 intermediates stay well inside VMEM (v7x: 64 MiB).
    TN = min(_round_up(tn, 128), _round_up(N, 128))
    if _round_up(N, 128) >= 256:
        TN = min(TN, _round_up(pl.cdiv(N, 2), 128))
    vmem_budget = 24 << 20                      # conservative budget for big-tile temps
    tn_cap = max(128, (vmem_budget // (6 * 4 * M_pad)) // 128 * 128)
    TN = min(TN, tn_cap)
    N_pad = _round_up(N, TN)

    # x stays in natural (N, D) layout — no wrapper transpose.  Zero-pad the batch
    # axis only when it is not tile-aligned (padded rows give finite phi <= 1 and the
    # corresponding output columns are sliced off below).
    x_f32 = x.astype(jnp.float32)
    if N_pad != N:
        x_f32 = jnp.pad(x_f32, ((0, N_pad - N), (0, 0)))

    # Tiny resident operands with the Gaussian constants pre-folded (means/weight are
    # small and constant, so this is not the "pre-scale big inputs" anti-pattern).
    means_f32 = means.astype(jnp.float32)
    a = jnp.zeros((M_pad, D), jnp.float32).at[:M].set(2.0 * s * means_f32)
    c = jnp.zeros((M_pad, 1), jnp.float32).at[:M, 0].set(
        -s * jnp.sum(means_f32 * means_f32, axis=1))
    nsr = jnp.full((1, D), -s, jnp.float32)     # -s row for the ||x||^2 contraction
    w_col = jnp.zeros((M_pad, 1), jnp.float32).at[:M, 0].set(
        weight.astype(jnp.float32).reshape(-1))
    b_smem = bias.astype(jnp.float32).reshape(1, 1)

    out_t = pl.pallas_call(
        linear_classifier_kernel,
        out_shape=jax.ShapeDtypeStruct((1, N_pad), jnp.float32),
        grid=(N_pad // TN,),
        in_specs=[
            pl.BlockSpec((TN, D), lambda i: (i, 0)),            # x tile, streamed
            pl.BlockSpec((M_pad, D), lambda i: (0, 0)),         # (2s)*mu, resident
            pl.BlockSpec((1, D), lambda i: (0, 0)),             # -s row, resident
            pl.BlockSpec((M_pad, 1), lambda i: (0, 0)),         # -s*||mu||^2, resident
            pl.BlockSpec((M_pad, 1), lambda i: (0, 0)),         # linear weight column
            pl.BlockSpec(memory_space=pltpu.MemorySpace.SMEM),  # bias scalar in SMEM
        ],
        out_specs=pl.BlockSpec((1, TN), lambda i: (0, i)),      # lane-dense output
        compiler_params=pltpu.CompilerParams(
            dimension_semantics=("parallel",),
        ),
        cost_estimate=pl.CostEstimate(
            flops=2 * N * M * D,
            transcendentals=N * M,
            bytes_accessed=4 * (N * D + M * D + N),
        ),
    )(x_f32, a, nsr, c, w_col, b_smem)

    return out_t[0, :N].reshape(N, 1)


if __name__ == "__main__":
    # Small shapes implied by the module: x (N, D), means (M, D), Linear(M, 1).
    N, D, M = 8, 16, 32
    VAR = 1.0  # GaussianBasisFunctions default

    key = jax.random.PRNGKey(0)
    k_x, k_mu, k_w, k_b = jax.random.split(key, 4)

    x = jax.random.normal(k_x, (N, D), dtype=jnp.float32)
    means = jax.random.normal(k_mu, (M, D), dtype=jnp.float32)

    # Deterministic nn.Linear-style init (uniform in +/- 1/sqrt(fan_in)).
    bound = 1.0 / (M ** 0.5)
    weight = jax.random.uniform(k_w, (1, M), jnp.float32, -bound, bound)
    bias = jax.random.uniform(k_b, (1,), jnp.float32, -bound, bound)

    out = linear_classifier(x, means, weight, bias, var=VAR)
    out = jax.block_until_ready(out)

    # Pure-JAX reference (direct broadcast-subtract form) for a sanity check.
    phi_ref = jnp.exp(
        -jnp.sum((x[:, None, :] - means[None, :, :]) ** 2, axis=-1) / (2.0 * VAR))
    ref = phi_ref @ weight.T + bias

    assert out.shape == (N, 1), out.shape
    assert jnp.allclose(out, ref, atol=1e-5, rtol=1e-5), (
        f"mismatch vs reference: max abs err {jnp.max(jnp.abs(out - ref))}")

    # TODO(synk): nn.Softplus (`self.af`) and `reweight()` are defined on the module
    # but never used in forward(); intentionally not implemented.

    print("KERNEL_OK")
</pallas_src>

<mosaic_0001>
module attributes {stable_mosaic.version = 11 : i64} {
  func.func @linear_classifier_kernel(%arg0: i32, %arg1: memref<128x16xf32, #tpu.memory_space<vmem>>, %arg2: memref<32x16xf32, #tpu.memory_space<vmem>>, %arg3: memref<1x16xf32, #tpu.memory_space<vmem>>, %arg4: memref<32x1xf32, #tpu.memory_space<vmem>>, %arg5: memref<32x1xf32, #tpu.memory_space<vmem>>, %arg6: memref<1x1xf32, #tpu.memory_space<smem>>, %arg7: memref<1x128xf32, #tpu.memory_space<vmem>>) attributes {dimension_semantics = [#tpu.dimension_semantics<parallel>], iteration_bounds = array<i64: 1>, scalar_prefetch = 0 : i64, scratch_operands = 0 : i64, tpu.core_type = #tpu.core_type<tc>, window_params = [{transform_indices = @transform_0, window_bounds = array<i64: 128, 16>}, {pipeline_mode = #tpu.pipeline_mode<synchronous>, transform_indices = @transform_1, window_bounds = array<i64: 32, 16>}, {pipeline_mode = #tpu.pipeline_mode<synchronous>, transform_indices = @transform_2, window_bounds = array<i64: 1, 16>}, {pipeline_mode = #tpu.pipeline_mode<synchronous>, transform_indices = @transform_3, window_bounds = array<i64: 32, 1>}, {pipeline_mode = #tpu.pipeline_mode<synchronous>, transform_indices = @transform_4, window_bounds = array<i64: 32, 1>}, {transform_indices = @transform_5, window_bounds = array<i64: 1, 1>}, {transform_indices = @transform_6, window_bounds = array<i64: 1, 128>}]} {
    %c0 = arith.constant 0 : index
    %c0_0 = arith.constant 0 : index
    %0 = vector.load %arg1[%c0, %c0_0] : memref<128x16xf32, #tpu.memory_space<vmem>>, vector<128x16xf32>
    %c0_1 = arith.constant 0 : index
    %c0_2 = arith.constant 0 : index
    %1 = vector.load %arg2[%c0_1, %c0_2] : memref<32x16xf32, #tpu.memory_space<vmem>>, vector<32x16xf32>
    %cst = arith.constant dense<0.000000e+00> : vector<32x128xf32>
    %2 = tpu.matmul %1, %0, %cst {dimension_numbers = #tpu.dot_dimension_numbers<[1], [1], [0], [0], [0, 0, 1, 0], [], []>} : vector<32x16xf32>, vector<128x16xf32>, vector<32x128xf32> -> vector<32x128xf32>
    %c0_3 = arith.constant 0 : index
    %c0_4 = arith.constant 0 : index
    %3 = vector.load %arg3[%c0_3, %c0_4] : memref<1x16xf32, #tpu.memory_space<vmem>>, vector<1x16xf32>
    %4 = arith.mulf %0, %0 : vector<128x16xf32>
    %cst_5 = arith.constant dense<0.000000e+00> : vector<1x128xf32>
    %5 = tpu.matmul %3, %4, %cst_5 {dimension_numbers = #tpu.dot_dimension_numbers<[1], [1], [0], [0], [0, 0, 1, 0], [], []>} : vector<1x16xf32>, vector<128x16xf32>, vector<1x128xf32> -> vector<1x128xf32>
    %6 = vector.broadcast %5 : vector<1x128xf32> to vector<32x128xf32>
    %7 = arith.addf %2, %6 : vector<32x128xf32>
    %c0_6 = arith.constant 0 : index
    %c0_7 = arith.constant 0 : index
    %8 = vector.load %arg4[%c0_6, %c0_7] : memref<32x1xf32, #tpu.memory_space<vmem>>, vector<32x1xf32>
    %9 = vector.broadcast %8 : vector<32x1xf32> to vector<32x128xf32>
    %10 = arith.addf %7, %9 : vector<32x128xf32>
    %11 = math.exp %10 : vector<32x128xf32>
    %cst_8 = arith.constant 1.000000e+00 : f32
    %12 = vector.broadcast %cst_8 : f32 to vector<32x128xf32>
    %13 = arith.minimumf %11, %12 : vector<32x128xf32>
    %c0_9 = arith.constant 0 : index
    %c0_10 = arith.constant 0 : index
    %14 = vector.load %arg5[%c0_9, %c0_10] : memref<32x1xf32, #tpu.memory_space<vmem>>, vector<32x1xf32>
    %15 = vector.broadcast %14 : vector<32x1xf32> to vector<32x128xf32>
    %16 = arith.mulf %13, %15 : vector<32x128xf32>
    %cst_11 = arith.constant dense<0.000000e+00> : vector<128xf32>
    %17 = vector.multi_reduction <add>, %16, %cst_11 [0] : vector<32x128xf32> to vector<128xf32>
    %18 = vector.shape_cast %17 : vector<128xf32> to vector<1x128xf32>
    %c0_12 = arith.constant 0 : index
    %c0_13 = arith.constant 0 : index
    %19 = memref.load %arg6[%c0_12, %c0_13] : memref<1x1xf32, #tpu.memory_space<smem>>
    %20 = vector.broadcast %19 : f32 to vector<1x128xf32>
    %21 = arith.addf %18, %20 : vector<1x128xf32>
    %c0_14 = arith.constant 0 : index
    %c0_15 = arith.constant 0 : index
    %22 = vector.load %arg7[%c0_14, %c0_15] : memref<1x128xf32, #tpu.memory_space<vmem>>, vector<1x128xf32>
    tpu.vector_store %arg7[%c0_14, %c0_15], %21 {strides = array<i32>} : memref<1x128xf32, #tpu.memory_space<vmem>>, vector<1x128xf32>,
    return
  }
  func.func @transform_0(%arg0: i32) -> (i32, i32) {
    %c0_i32 = arith.constant 0 : i32
    %c0_i32_0 = arith.constant 0 : i32
    return %arg0, %c0_i32 : i32, i32
  }
  func.func @transform_1(%arg0: i32) -> (i32, i32) {
    %c0_i32 = arith.constant 0 : i32
    %c0_i32_0 = arith.constant 0 : i32
    %c0_i32_1 = arith.constant 0 : i32
    return %c0_i32, %c0_i32_0 : i32, i32
  }
  func.func @transform_2(%arg0: i32) -> (i32, i32) {
    %c0_i32 = arith.constant 0 : i32
    %c0_i32_0 = arith.constant 0 : i32
    %c0_i32_1 = arith.constant 0 : i32
    return %c0_i32, %c0_i32_0 : i32, i32
  }
  func.func @transform_3(%arg0: i32) -> (i32, i32) {
    %c0_i32 = arith.constant 0 : i32
    %c0_i32_0 = arith.constant 0 : i32
    %c0_i32_1 = arith.constant 0 : i32
    return %c0_i32, %c0_i32_0 : i32, i32
  }
  func.func @transform_4(%arg0: i32) -> (i32, i32) {
    %c0_i32 = arith.constant 0 : i32
    %c0_i32_0 = arith.constant 0 : i32
    %c0_i32_1 = arith.constant 0 : i32
    return %c0_i32, %c0_i32_0 : i32, i32
  }
  func.func @transform_5(%arg0: i32) -> (i32, i32) {
    %c0_i32 = arith.constant 0 : i32
    %c0_i32_0 = arith.constant 0 : i32
    %c0_i32_1 = arith.constant 0 : i32
    return %c0_i32, %c0_i32_0 : i32, i32
  }
  func.func @transform_6(%arg0: i32) -> (i32, i32) {
    %c0_i32 = arith.constant 0 : i32
    %c0_i32_0 = arith.constant 0 : i32
    return %c0_i32, %arg0 : i32, i32
  }
}

</mosaic_0001>

<llo_original>
// kernel: tpu_custom_call.1
$region0: #{tpu_custom_call.1}
  #allocation0 [shape = 'u32[]', space=smem, size = 0x4, offset = 0x4, fixed_abs, tag = 'smem constant byte address 0x4 - core index']
  #allocation1 [shape = 'u32[72,128]{1,0:T(1,128)}', space=vmem, size = 0x9000, scoped, tag = 'internal scratch']
  #allocation2 [shape = 'f32[1,1]{1,0:T(1,128)S(6)}', space=smem, size = 0x200, scoped, tag = 'scoped memory for tpu_custom_call.1']
  %s0 = inlined_call_operand.vmem [shape: f32[128,16], index: 0, kind: input, shape index: {}]
  %s1 = inlined_call_operand.vmem [shape: f32[32,16], index: 1, kind: input, shape index: {}]
  %s2 = inlined_call_operand.vmem [shape: f32[1,16], index: 2, kind: input, shape index: {}]
  %s3 = inlined_call_operand.vmem [shape: f32[32,1], index: 3, kind: input, shape index: {}]
  %s4 = inlined_call_operand.vmem [shape: f32[32,1], index: 4, kind: input, shape index: {}]
  %s5 = inlined_call_operand.<no memory space> [shape: f32[1,1], index: 5, kind: input, shape index: {}]
  %s6 = inlined_call_operand.hbm [shape: f32[1,128], index: 6, kind: output, shape index: {}]
  %s7 = sld [smem:[#allocation0]]
  $region34: #{tpu_custom_call.1} parent=0
    _
  %s9 = ssub.s32 1, %s7
  %s10 = scalar_select 0, %s9, %s7
  %11 = sst [smem:[#allocation2]] %s5
  $region1: #{tpu_custom_call.1} parent=0
    #allocation3 [shape = 'u8[512]{0}', space=vmem, size = 0x400, scoped, tag = 'output window, operand 0, single buffered']
    #allocation4 [shape = 's32[1]{0}', space=sflag, size = 0x4, scoped, tag = 'scoped memory for tpu_custom_call.1']
    %12 = vsyncpa [#allocation4], 0
    // Predicated region
    $region2: #{tpu_custom_call.1} parent=1 // pred_check
      _
    $region3: #{tpu_custom_call.1} parent=1 // pred_check_branch
      %14 = sbr.rel (0) target = $region5
    $region4: #{tpu_custom_call.1} parent=1 // pred_region
      _
    $region5: #{tpu_custom_call.1} parent=1 // pred_fallthru
      _
    // Predicated region
    $region6: #{tpu_custom_call.1} parent=1 // pred_check
      _
    $region7: #{tpu_custom_call.1} parent=1 // pred_check_branch
      %16 = sbr.rel (0) target = $region9
    $region8: #{tpu_custom_call.1} parent=1 // pred_region
      _
    $region9: #{tpu_custom_call.1} parent=1 // pred_fallthru
      _
    // Predicated region
    $region10: #{tpu_custom_call.1} parent=1 // pred_check
      _
    $region11: #{tpu_custom_call.1} parent=1 // pred_check_branch
      %18 = sbr.rel (0) target = $region13
    $region12: #{tpu_custom_call.1} parent=1 // pred_region
      _
    $region13: #{tpu_custom_call.1} parent=1 // pred_fallthru
      _
    // Predicated region
    $region14: #{tpu_custom_call.1} parent=1 // pred_check
      _
    $region15: #{tpu_custom_call.1} parent=1 // pred_check_branch
      %20 = sbr.rel (0) target = $region17
    $region16: #{tpu_custom_call.1} parent=1 // pred_region
      _
    $region17: #{tpu_custom_call.1} parent=1 // pred_fallthru
      _
    // Predicated region
    $region18: #{tpu_custom_call.1} parent=1 // pred_check
      _
    $region19: #{tpu_custom_call.1} parent=1 // pred_check_branch
      %22 = sbr.rel (0) target = $region21
    $region20: #{tpu_custom_call.1} parent=1 // pred_region
      _
    $region21: #{tpu_custom_call.1} parent=1 // pred_fallthru
      _
    // Predicated region
    $region22: #{tpu_custom_call.1} parent=1 // pred_check
      _
    $region23: #{tpu_custom_call.1} parent=1 // pred_check_branch
      %24 = sbr.rel (0) target = $region25
    $region24: #{tpu_custom_call.1} parent=1 // pred_region
      _
    $region25: #{tpu_custom_call.1} parent=1 // pred_fallthru
      _
    %v25 = vld [vmem:[%s0] sm:$0xff]
    %v26 = vld [vmem:[%s0 + $0x8] sm:$0xff]
    %v27 = vld [vmem:[%s0 + $0x10] sm:$0xff]
    %v28 = vld [vmem:[%s0 + $0x18] sm:$0xff]
    %v29 = vld [vmem:[%s0 + $0x20] sm:$0xff]
    %v30 = vld [vmem:[%s0 + $0x28] sm:$0xff]
    %v31 = vld [vmem:[%s0 + $0x30] sm:$0xff]
    %v32 = vld [vmem:[%s0 + $0x38] sm:$0xff]
    %v33 = vld [vmem:[%s0 + $0x40] sm:$0xff]
    %v34 = vld [vmem:[%s0 + $0x48] sm:$0xff]
    %v35 = vld [vmem:[%s0 + $0x50] sm:$0xff]
    %v36 = vld [vmem:[%s0 + $0x58] sm:$0xff]
    %v37 = vld [vmem:[%s0 + $0x60] sm:$0xff]
    %v38 = vld [vmem:[%s0 + $0x68] sm:$0xff]
    %v39 = vld [vmem:[%s0 + $0x70] sm:$0xff]
    %v40 = vld [vmem:[%s0 + $0x78] sm:$0xff]
    %v41 = vld [vmem:[%s1] sm:$0xff]
    %v42 = vld [vmem:[%s1 + $0x8] sm:$0xff]
    %v43 = vld [vmem:[%s1 + $0x10] sm:$0xff]
    %v44 = vld [vmem:[%s1 + $0x18] sm:$0xff]
    %v45 = vld [vmem:[%s2] sm:$0x1]
    %v46 = vmul.f32 %v25, %v25
    %v47 = vmul.f32 %v26, %v26
    %v48 = vmul.f32 %v27, %v27
    %v49 = vmul.f32 %v28, %v28
    %v50 = vmul.f32 %v29, %v29
    %v51 = vmul.f32 %v30, %v30
    %v52 = vmul.f32 %v31, %v31
    %v53 = vmul.f32 %v32, %v32
    %v54 = vmul.f32 %v33, %v33
    %v55 = vmul.f32 %v34, %v34
    %v56 = vmul.f32 %v35, %v35
    %v57 = vmul.f32 %v36, %v36
    %v58 = vmul.f32 %v37, %v37
    %v59 = vmul.f32 %v38, %v38
    %v60 = vmul.f32 %v39, %v39
    %v61 = vmul.f32 %v40, %v40
    %vm62 = vcmask 130048
    %v64 = vsel %vm62, %v45, 0
    %v67 = vsel %vm62, %v46, 0
    %v70 = vsel %vm62, %v47, 0
    %v73 = vsel %vm62, %v48, 0
    %v76 = vsel %vm62, %v49, 0
    %v79 = vsel %vm62, %v50, 0
    %v82 = vsel %vm62, %v51, 0
    %v85 = vsel %vm62, %v52, 0
    %v88 = vsel %vm62, %v53, 0
    %v91 = vsel %vm62, %v54, 0
    %v94 = vsel %vm62, %v55, 0
    %v97 = vsel %vm62, %v56, 0
    %v100 = vsel %vm62, %v57, 0
    %v103 = vsel %vm62, %v58, 0
    %v106 = vsel %vm62, %v59, 0
    %v109 = vsel %vm62, %v60, 0
    %v112 = vsel %vm62, %v61, 0
    %114 = vmatpush.xpose.msra.mxu0 %v112
    %115 = vmatpush.xpose.msra.mxu0 %v109
    %116 = vmatpush.xpose.msra.mxu0 %v106
    %117 = vmatpush.xpose.msra.mxu0 %v103
    %118 = vmatpush.xpose.msra.mxu0 %v100
    %119 = vmatpush.xpose.msra.mxu0 %v97
    %120 = vmatpush.xpose.msra.mxu0 %v94
    %121 = vmatpush.xpose.msra.mxu0 %v91
    %122 = vmatpush.xpose.msra.mxu0 %v88
    %123 = vmatpush.xpose.msra.mxu0 %v85
    %124 = vmatpush.xpose.msra.mxu0 %v82
    %125 = vmatpush.xpose.msra.mxu0 %v79
    %126 = vmatpush.xpose.msra.mxu0 %v76
    %127 = vmatpush.xpose.msra.mxu0 %v73
    %128 = vmatpush.xpose.msra.mxu0 %v70
    %129 = vmatpush.xpose.msra.mxu0 %v67
    %130 = vmatmul.f32.gmra.mxu0 %v64
    %v131 = vpop.f32.mrf.mxu0
    %v132 = vadd.f32 0.0, %v131
    %133 = vdwg.mxu0
    %v134 = vperm.slane %v132, 0
    %v136 = vsel %vm62, %v41, 0
    %v139 = vsel %vm62, %v42, 0
    %v142 = vsel %vm62, %v43, 0
    %v145 = vsel %vm62, %v44, 0
    %v148 = vsel %vm62, %v25, 0
    %v151 = vsel %vm62, %v26, 0
    %v154 = vsel %vm62, %v27, 0
    %v157 = vsel %vm62, %v28, 0
    %v160 = vsel %vm62, %v29, 0
    %v163 = vsel %vm62, %v30, 0
    %v166 = vsel %vm62, %v31, 0
    %v169 = vsel %vm62, %v32, 0
    %v172 = vsel %vm62, %v33, 0
    %v175 = vsel %vm62, %v34, 0
    %v178 = vsel %vm62, %v35, 0
    %v181 = vsel %vm62, %v36, 0
    %v184 = vsel %vm62, %v37, 0
    %v187 = vsel %vm62, %v38, 0
    %v190 = vsel %vm62, %v39, 0
    %v193 = vsel %vm62, %v40, 0
    %195 = vmatpush.xpose.msra.mxu0 %v193
    %196 = vmatpush.xpose.msra.mxu0 %v190
    %197 = vmatpush.xpose.msra.mxu0 %v187
    %198 = vmatpush.xpose.msra.mxu0 %v184
    %199 = vmatpush.xpose.msra.mxu0 %v181
    %200 = vmatpush.xpose.msra.mxu0 %v178
    %201 = vmatpush.xpose.msra.mxu0 %v175
    %202 = vmatpush.xpose.msra.mxu0 %v172
    %203 = vmatpush.xpose.msra.mxu0 %v169
    %204 = vmatpush.xpose.msra.mxu0 %v166
    %205 = vmatpush.xpose.msra.mxu0 %v163
    %206 = vmatpush.xpose.msra.mxu0 %v160
    %207 = vmatpush.xpose.msra.mxu0 %v157
    %208 = vmatpush.xpose.msra.mxu0 %v154
    %209 = vmatpush.xpose.msra.mxu0 %v151
    %210 = vmatpush.xpose.msra.mxu0 %v148
    %211 = vmatmul.f32.gmra.mxu0 %v136
    %v212 = vpop.f32.mrf.mxu0
    %v213 = vadd.f32 %v134, %v212
    %214 = vmatmul.f32.gmra.mxu0 %v139
    %v215 = vpop.f32.mrf.mxu0
    %v216 = vadd.f32 %v134, %v215
    %217 = vmatmul.f32.gmra.mxu0 %v142
    %v218 = vpop.f32.mrf.mxu0
    %v219 = vadd.f32 %v134, %v218
    %220 = vmatmul.f32.gmra.mxu0 %v145
    %v221 = vpop.f32.mrf.mxu0
    %v222 = vadd.f32 %v134, %v221
    %223 = vdwg.mxu0
    %v224 = vld [vmem:[%s3] sm:$0xff]
    %v225 = vld [vmem:[%s3 + $0x8] sm:$0xff]
    %v226 = vld [vmem:[%s3 + $0x10] sm:$0xff]
    %v227 = vld [vmem:[%s3 + $0x18] sm:$0xff]
    %229 = vset.pattern.permute.xlu0 0
    %230 = vperm.xlu0 %229, %v224
    %v231 = vpop.permute.xlu0 %230
    %234 = vset.pattern.permute.xlu0 0
    %235 = vperm.xlu0 %234, %v225
    %v236 = vpop.permute.xlu0 %235
    %239 = vset.pattern.permute.xlu0 0
    %240 = vperm.xlu0 %239, %v226
    %v241 = vpop.permute.xlu0 %240
    %244 = vset.pattern.permute.xlu0 0
    %245 = vperm.xlu0 %244, %v227
    %v246 = vpop.permute.xlu0 %245
    %v248 = vadd.f32 %v213, %v231
    %v249 = vadd.f32 %v216, %v236
    %v250 = vadd.f32 %v219, %v241
    %v251 = vadd.f32 %v222, %v246
    %v252 = vmul.f32 %v248, 1.442695
    %v253 = vpow.pop %v252
    %v254 = vmul.f32 %v249, 1.442695
    %v255 = vpow.pop %v254
    %v256 = vmul.f32 %v250, 1.442695
    %v257 = vpow.pop %v256
    %v258 = vmul.f32 %v251, 1.442695
    %v259 = vpow.pop %v258
    %v260 = vmin.f32 %v253, 1.0
    %v261 = vmin.f32 %v255, 1.0
    %v262 = vmin.f32 %v257, 1.0
    %v263 = vmin.f32 %v259, 1.0
    %v264 = vld [vmem:[%s4] sm:$0xff]
    %v265 = vld [vmem:[%s4 + $0x8] sm:$0xff]
    %v266 = vld [vmem:[%s4 + $0x10] sm:$0xff]
    %v267 = vld [vmem:[%s4 + $0x18] sm:$0xff]
    %269 = vset.pattern.permute.xlu0 0
    %270 = vperm.xlu0 %269, %v264
    %v271 = vpop.permute.xlu0 %270
    %274 = vset.pattern.permute.xlu0 0
    %275 = vperm.xlu0 %274, %v265
    %v276 = vpop.permute.xlu0 %275
    %279 = vset.pattern.permute.xlu0 0
    %280 = vperm.xlu0 %279, %v266
    %v281 = vpop.permute.xlu0 %280
    %284 = vset.pattern.permute.xlu0 0
    %285 = vperm.xlu0 %284, %v267
    %v286 = vpop.permute.xlu0 %285
    %v288 = vmul.f32 %v260, %v271
    %v289 = vmul.f32 %v261, %v276
    %v290 = vmul.f32 %v262, %v281
    %v291 = vmul.f32 %v263, %v286
    %v292 = vadd.f32 %v288, %v289
    %v293 = vadd.f32 %v292, %v290
    %v294 = vadd.f32 %v293, %v291
    %v295 = vrot.slane %v294, 4
    %v296 = vadd.f32 %v294, %v295
    %v297 = vrot.slane %v296, 2
    %v298 = vadd.f32 %v296, %v297
    %v299 = vrot.slane %v298, 1
    %v300 = vadd.f32 %v298, %v299
    %s301 = sld [smem:[#allocation2]]
    %v302 = vstv %s301
    %v303 = vadd.f32 %v300, %v302
    %304 = vst [vmem:[#allocation3] sm:$0x1] %v303
    // Predicated region
    $region26: #{tpu_custom_call.1} parent=1 // pred_check
      _
    $region27: #{tpu_custom_call.1} parent=1 // pred_check_branch
      %306 = sbr.rel (0) target = $region29
    $region28: #{tpu_custom_call.1} parent=1 // pred_region
      %308 = vsyncadd [#allocation4], 0
      %s310 = sshll.u32 [#allocation3], 4
      %s311 = int_to_ptr.vmem [resolvable:$true] %s310
      %s312 = sshll.u32 %s6, 4
      %s313 = int_to_ptr.hbm [resolvable:$true] %s312
      %315 = dma.vmem_to_hbm [thread:$0]  %s311, 16, %s313, [#allocation4]
    $region29: #{tpu_custom_call.1} parent=1 // pred_fallthru
      _
    // Predicated region
    $region30: #{tpu_custom_call.1} parent=1 // pred_check
      _
    $region31: #{tpu_custom_call.1} parent=1 // pred_check_branch
      %317 = sbr.rel (0) target = $region33
    $region32: #{tpu_custom_call.1} parent=1 // pred_region
      %319 = dma.done [#allocation4], 16
    $region33: #{tpu_custom_call.1} parent=1 // pred_fallthru
      _
    %320 = vsyncpa [#allocation4], 1

</llo_original>
